<compile_context>
chip_gen: v7x
topology: tpu7x:2x2x1
jax: 0.10.0
libtpu: 0.0.40
codegen_flags: <defaults>
</compile_context>

<pallas_src>
from typing import Optional

import jax
import jax.numpy as jnp
from jax.experimental import pallas as pl
from jax.experimental.pallas import tpu as pltpu


def _round_up(x: int, m: int) -> int:
    return ((x + m - 1) // m) * m


def _physical_vmem_bytes() -> int:
    """Physical VMEM of the current TPU generation (fallback: 128 MiB)."""
    try:
        info = pltpu.get_tpu_info()
        v = getattr(info, "vmem_capacity_bytes", None)
        if v:
            return int(v)
    except Exception:
        pass
    return 128 * 1024 * 1024


def _make_conv_block_kernel(K: int, stride: int, dilation: int, cout_pg: int,
                            cin_pg: int, tl: int, pre_slope: Optional[float],
                            post_slope: Optional[float]):
    """Kernel body for one (batch, group, Lout-tile) grid step."""

    def leaky(v, slope):
        return jnp.where(v >= 0, v, jnp.asarray(slope, v.dtype) * v)

    def kernel(xc_ref, xh_ref, w_ref, b_ref, o_ref):
        # Current tile + narrow right halo; every tap below is a STATIC contiguous lane
        # slice of this (cin_pg, [s,] TL+HALO) window (no dynamic / strided lane loads).
        xcat = jnp.concatenate([xc_ref[...], xh_ref[...]], axis=-1)
        if pre_slope is not None:            # fused "nonlinear_first" LeakyReLU
            xcat = leaky(xcat, pre_slope)

        taps = []
        for k in range(K):                   # K static contiguous lane slices
            ph = (k * dilation) % stride
            off = (k * dilation) // stride
            if stride == 1:
                taps.append(xcat[:, off:off + tl])            # (cin_pg, tl)
            else:
                taps.append(xcat[:, ph, off:off + tl])        # (cin_pg, tl)

        if cout_pg == 1:
            # A (1, K*cin_pg) matmul would use <1% of the MXU rows; accumulate elementwise
            # products on the VPU and do ONE cross-sublane reduction at the end.
            acc = jnp.zeros((cin_pg, tl), jnp.float32)
            for k in range(K):
                wk = w_ref[k].astype(jnp.float32)             # (cin_pg, 1)
                acc = acc + wk * taps[k].astype(jnp.float32)
            y = jnp.sum(acc, axis=0, keepdims=True)           # (1, tl)
        else:
            # One deep matmul per tile: (cout_pg, K*cin_pg) @ (K*cin_pg, tl), f32 acc.
            xstk = jnp.concatenate(taps, axis=0)              # (K*cin_pg, tl)
            y = jnp.dot(w_ref[...], xstk, preferred_element_type=jnp.float32)

        y = y + b_ref[...]                   # bias epilogue in f32
        if post_slope is not None:           # fused LeakyReLU
            y = leaky(y, post_slope)
        o_ref[...] = y.astype(o_ref.dtype)

    return kernel


def conv_block_1d(x, weight, bias, *, stride: int = 1, dilation: int = 1,
                  groups: int = 1, negative_slope: float = 0.1,
                  nonlinear_first: bool = False, lane_tile: int = 1024,
                  compute_dtype=jnp.bfloat16, out_dtype=None):
    """ConvBlock1d forward: (LeakyReLU?) -> pad -> Conv1d -> (LeakyReLU?).

    x:      (B, Cin, L) float32
    weight: (Cout, Cin // groups, K)   (PyTorch Conv1d layout)
    bias:   (Cout,)
    Returns (B, Cout, Lout), Lout = floor((L + 2p - d*(K-1) - 1)/stride) + 1,
    p = (K*d - d)//2 — identical to the PyTorch module.
    """
    B, Cin, L = x.shape
    Cout, cin_pg, K = weight.shape
    assert Cin == cin_pg * groups and Cout % groups == 0
    cout_pg = Cout // groups
    s, d = int(stride), int(dilation)
    comp_dtype = jnp.dtype(compute_dtype)
    out_dt = jnp.dtype(out_dtype) if out_dtype is not None else jnp.dtype(jnp.float32)

    pad = (K * d - d) // 2
    Lout = (L + 2 * pad - d * (K - 1) - 1) // s + 1
    off_max = ((K - 1) * d) // s                  # right halo, in output-column units

    # Narrow right halo: a 128-multiple just wide enough for all kernel taps.
    HALO = max(128, _round_up(off_max, 128))

    # Lane tile: multiple of 128 (lane-dense output stores) and of HALO (so the halo's
    # block index (t+1)*TL/HALO is exact). Tiny-channel layers get a larger target tile.
    target = int(lane_tile)
    if cout_pg * cin_pg <= 256:
        target = max(target, 2048)
    TL = min(target, _round_up(Lout, 128))
    TL = max(128, (TL // 128) * 128)
    TL = _round_up(TL, HALO)

    comp_isz = comp_dtype.itemsize
    out_isz = out_dt.itemsize
    phase = s if s > 1 else 1

    def per_step_vmem(tl: int) -> int:
        xs = cin_pg * phase * tl * comp_isz * 2           # x tile, double-buffered
        xh = cin_pg * phase * HALO * comp_isz * 2         # halo, double-buffered
        ws = cout_pg * K * cin_pg * comp_isz * 2          # weight slab (pipelined buffers)
        bs = cout_pg * 4 * 2
        os_ = cout_pg * tl * out_isz * 2                  # output tile, double-buffered
        xcat = cin_pg * phase * (tl + HALO) * comp_isz    # in-kernel window
        if cout_pg == 1:
            tmp = cin_pg * tl * 4 + tl * 4
        else:
            tmp = K * cin_pg * tl * comp_isz + cout_pg * tl * 4
        return xs + xh + ws + bs + os_ + xcat + tmp

    # Generation-aware budget: ~70% of physical VMEM (64 MiB on v7x, 128 MiB on v5e/v6e).
    budget = int(_physical_vmem_bytes() * 0.7)
    while TL > HALO and per_step_vmem(TL) > budget:
        nt = max(HALO, ((TL // 2) // HALO) * HALO)
        if nt == TL:
            break
        TL = nt

    num_lt = pl.cdiv(Lout, TL)
    Lout_pad = num_lt * TL
    T_cols = Lout_pad + HALO                      # halo columns past the last tile
    ratio = TL // HALO

    # Single fused pad: conv "same" padding + tile/halo tail (no per-tap padding).
    right = T_cols * s - L - pad
    assert right >= 0
    x_p = jnp.pad(x, ((0, 0), (0, 0), (pad, right)))

    if s == 1:
        x_in = x_p.reshape(B, groups, cin_pg, T_cols).astype(comp_dtype)
        x_cur = pl.BlockSpec((None, None, cin_pg, TL),
                             lambda b, g, t: (b, g, 0, t))
        x_hal = pl.BlockSpec((None, None, cin_pg, HALO),
                             lambda b, g, t: (b, g, 0, (t + 1) * ratio))
    else:
        # Phase split so each stride-s tap becomes a contiguous lane slice:
        #   x_ph[b, g, c, p, t] = x_padded[b, g*cin_pg + c, t*s + p]
        x_in = (x_p.reshape(B, groups, cin_pg, T_cols, s)
                .transpose(0, 1, 2, 4, 3)
                .astype(comp_dtype))                           # (B, G, cin_pg, s, T_cols)
        x_cur = pl.BlockSpec((None, None, cin_pg, s, TL),
                             lambda b, g, t: (b, g, 0, 0, t))
        x_hal = pl.BlockSpec((None, None, cin_pg, s, HALO),
                             lambda b, g, t: (b, g, 0, 0, (t + 1) * ratio))

    # Group-aware weight layout (no block-diagonal densification):
    #   general path : (G, cout_pg, K*cin_pg)  -> one deep MXU matmul per tile
    #   cout_pg == 1 : (G, K, cin_pg, 1)       -> VPU broadcast-multiply + single reduce
    w4 = weight.reshape(groups, cout_pg, cin_pg, K)
    if cout_pg == 1:
        w_in = w4.transpose(0, 3, 2, 1).astype(comp_dtype)         # (G, K, cin_pg, 1)
        w_spec = pl.BlockSpec((None, K, cin_pg, 1), lambda b, g, t: (g, 0, 0, 0))
    else:
        w_in = (w4.transpose(0, 1, 3, 2)                           # (G, cout_pg, K, cin_pg)
                .reshape(groups, cout_pg, K * cin_pg)
                .astype(comp_dtype))
        w_spec = pl.BlockSpec((None, cout_pg, K * cin_pg), lambda b, g, t: (g, 0, 0))
    b_in = bias.reshape(groups, cout_pg, 1).astype(jnp.float32)
    b_spec = pl.BlockSpec((None, cout_pg, 1), lambda b, g, t: (g, 0, 0))

    pre_slope = float(negative_slope) if (nonlinear_first and negative_slope != 1) else None
    post_slope = (float(negative_slope)
                  if (not nonlinear_first and negative_slope != 1) else None)

    kernel = _make_conv_block_kernel(K, s, d, cout_pg, cin_pg, TL,
                                     pre_slope, post_slope)

    # Cost hint: input fetched once + narrow halo refetch, weights re-DMA'd per (b, g).
    flops = 2 * B * groups * cout_pg * cin_pg * K * Lout_pad
    x_bytes = x_in.size * x_in.dtype.itemsize
    halo_bytes = B * Cin * phase * HALO * num_lt * comp_isz
    w_bytes = B * groups * cout_pg * cin_pg * K * comp_isz
    o_bytes = B * Cout * Lout_pad * out_isz
    bytes_accessed = int(x_bytes + halo_bytes + w_bytes + o_bytes)

    vmem_limit = int(min(budget, max(int(per_step_vmem(TL) * 1.5) + (4 << 20), 16 << 20)))

    out = pl.pallas_call(
        kernel,
        out_shape=jax.ShapeDtypeStruct((B, groups, cout_pg, Lout_pad), out_dt),
        grid=(B, groups, num_lt),
        in_specs=[x_cur, x_hal, w_spec, b_spec],
        out_specs=pl.BlockSpec((None, None, cout_pg, TL),
                               lambda b, g, t: (b, g, 0, t)),
        compiler_params=pltpu.CompilerParams(
            dimension_semantics=("parallel", "parallel", "parallel"),
            vmem_limit_bytes=vmem_limit),
        cost_estimate=pl.CostEstimate(flops=int(flops), transcendentals=0,
                                      bytes_accessed=bytes_accessed),
    )(x_in, x_in, w_in, b_in)

    return out.reshape(B, Cout, Lout_pad)[:, :, :Lout]


# ----------------------------------------------------------------------------- reference
def conv_block_1d_reference(x, weight, bias, *, stride, dilation, groups,
                            negative_slope, nonlinear_first):
    """Pure-JAX reference (lax.conv_general_dilated), matching the PyTorch module."""
    K = weight.shape[-1]
    pad = (K * dilation - dilation) // 2
    h = x
    if nonlinear_first and negative_slope != 1:
        h = jnp.where(h >= 0, h, negative_slope * h)
    y = jax.lax.conv_general_dilated(
        h, weight, window_strides=(stride,), padding=[(pad, pad)],
        rhs_dilation=(dilation,), dimension_numbers=("NCH", "OIH", "NCH"),
        feature_group_count=groups)
    y = y + bias[None, :, None]
    if (not nonlinear_first) and negative_slope != 1:
        y = jnp.where(y >= 0, y, negative_slope * y)
    return y


def init_conv_block_1d(key, in_channels, out_channels, kernel_size, groups=1):
    """nn.Conv1d default init (uniform +-1/sqrt(fan_in)); weight_norm at fresh init is
    the identity reparametrization, so plain weights reproduce the module exactly."""
    cin_pg = in_channels // groups
    bound = 1.0 / float(cin_pg * kernel_size) ** 0.5
    wk, bk = jax.random.split(key)
    w = jax.random.uniform(wk, (out_channels, cin_pg, kernel_size),
                           jnp.float32, -bound, bound)
    b = jax.random.uniform(bk, (out_channels,), jnp.float32, -bound, bound)
    return w, b


if __name__ == "__main__":
    key = jax.random.PRNGKey(0)
    kx, k1, k2, k3 = jax.random.split(key, 4)

    B, C0, L0 = 2, 8, 64
    x = jax.random.normal(kx, (B, C0, L0), dtype=jnp.float32)

    # Three ConvBlock1d configs covering: strided grouped conv, dilated conv with
    # nonlinear_first, and the Cout=1 / negative_slope=1 (no activation) case.
    blocks = [
        dict(in_channels=8, out_channels=16, kernel_size=5, stride=2, dilation=1,
             groups=2, negative_slope=0.1, nonlinear_first=False),
        dict(in_channels=16, out_channels=16, kernel_size=3, stride=1, dilation=2,
             groups=1, negative_slope=0.1, nonlinear_first=True),
        dict(in_channels=16, out_channels=1, kernel_size=3, stride=1, dilation=1,
             groups=1, negative_slope=1.0, nonlinear_first=False),
    ]
    params = [init_conv_block_1d(k, c["in_channels"], c["out_channels"],
                                 c["kernel_size"], c["groups"])
              for k, c in zip((k1, k2, k3), blocks)]

    def run_chain(x0, compute_dtype):
        h, outs = x0, []
        for (w, b), c in zip(params, blocks):
            h = conv_block_1d(h, w, b, stride=c["stride"], dilation=c["dilation"],
                              groups=c["groups"], negative_slope=c["negative_slope"],
                              nonlinear_first=c["nonlinear_first"],
                              compute_dtype=compute_dtype)
            outs.append(h)
        return outs

    def run_chain_ref(x0):
        h, outs = x0, []
        for (w, b), c in zip(params, blocks):
            h = conv_block_1d_reference(
                h, w, b, stride=c["stride"], dilation=c["dilation"],
                groups=c["groups"], negative_slope=c["negative_slope"],
                nonlinear_first=c["nonlinear_first"])
            outs.append(h)
        return outs

    ref = jax.block_until_ready(run_chain_ref(x))
    expected_shapes = [(B, 16, 32), (B, 16, 32), (B, 1, 32)]

    for dt in (jnp.float32, jnp.bfloat16):
        got = jax.block_until_ready(run_chain(x, dt))
        for g, r, es in zip(got, ref, expected_shapes):
            assert g.shape == es, (g.shape, es)
            assert bool(jnp.allclose(g, r, atol=2e-2, rtol=2e-2)), (
                f"mismatch for compute_dtype={dt}: "
                f"max_err={float(jnp.max(jnp.abs(g - r)))}")

    print("KERNEL_OK")
</pallas_src>

<mosaic_0001>
module attributes {stable_mosaic.version = 11 : i64} {
  func.func @kernel(%arg0: i32, %arg1: i32, %arg2: i32, %arg3: memref<1x1x4x2x128xf32, #tpu.memory_space<vmem>>, %arg4: memref<1x1x4x2x128xf32, #tpu.memory_space<vmem>>, %arg5: memref<1x8x20xf32, #tpu.memory_space<vmem>>, %arg6: memref<1x8x1xf32, #tpu.memory_space<vmem>>, %arg7: memref<1x1x8x128xf32, #tpu.memory_space<vmem>>) attributes {dimension_semantics = [#tpu.dimension_semantics<parallel>, #tpu.dimension_semantics<parallel>, #tpu.dimension_semantics<parallel>], iteration_bounds = array<i64: 2, 2, 1>, scalar_prefetch = 0 : i64, scratch_operands = 0 : i64, tpu.core_type = #tpu.core_type<tc>, window_params = [{transform_indices = @transform_0, window_bounds = array<i64: 1, 1, 4, 2, 128>}, {transform_indices = @transform_1, window_bounds = array<i64: 1, 1, 4, 2, 128>}, {transform_indices = @transform_2, window_bounds = array<i64: 1, 8, 20>}, {transform_indices = @transform_3, window_bounds = array<i64: 1, 8, 1>}, {transform_indices = @transform_4, window_bounds = array<i64: 1, 1, 8, 128>}]} {
    %c0 = arith.constant 0 : index
    %c0_0 = arith.constant 0 : index
    %c0_1 = arith.constant 0 : index
    %c0_2 = arith.constant 0 : index
    %c0_3 = arith.constant 0 : index
    %0 = vector.load %arg3[%c0, %c0_0, %c0_1, %c0_2, %c0_3] : memref<1x1x4x2x128xf32, #tpu.memory_space<vmem>>, vector<1x1x4x2x128xf32>
    %1 = vector.shape_cast %0 : vector<1x1x4x2x128xf32> to vector<4x2x128xf32>
    %c0_4 = arith.constant 0 : index
    %c0_5 = arith.constant 0 : index
    %c0_6 = arith.constant 0 : index
    %c0_7 = arith.constant 0 : index
    %c0_8 = arith.constant 0 : index
    %2 = vector.load %arg4[%c0_4, %c0_5, %c0_6, %c0_7, %c0_8] : memref<1x1x4x2x128xf32, #tpu.memory_space<vmem>>, vector<1x1x4x2x128xf32>
    %3 = vector.shape_cast %2 : vector<1x1x4x2x128xf32> to vector<4x2x128xf32>
    %4 = tpu.concatenate %1, %3 in 2 : vector<4x2x128xf32>, vector<4x2x128xf32> -> vector<4x2x256xf32>
    %5 = vector.extract_strided_slice %4 {offsets = [0, 0, 0], sizes = [4, 1, 128], strides = [1, 1, 1]} : vector<4x2x256xf32> to vector<4x1x128xf32>
    %6 = vector.shape_cast %5 : vector<4x1x128xf32> to vector<4x128xf32>
    %7 = vector.extract_strided_slice %4 {offsets = [0, 1, 0], sizes = [4, 1, 128], strides = [1, 1, 1]} : vector<4x2x256xf32> to vector<4x1x128xf32>
    %8 = vector.shape_cast %7 : vector<4x1x128xf32> to vector<4x128xf32>
    %9 = vector.extract_strided_slice %4 {offsets = [0, 0, 1], sizes = [4, 1, 128], strides = [1, 1, 1]} : vector<4x2x256xf32> to vector<4x1x128xf32>
    %10 = vector.shape_cast %9 : vector<4x1x128xf32> to vector<4x128xf32>
    %11 = vector.extract_strided_slice %4 {offsets = [0, 1, 1], sizes = [4, 1, 128], strides = [1, 1, 1]} : vector<4x2x256xf32> to vector<4x1x128xf32>
    %12 = vector.shape_cast %11 : vector<4x1x128xf32> to vector<4x128xf32>
    %13 = vector.extract_strided_slice %4 {offsets = [0, 0, 2], sizes = [4, 1, 128], strides = [1, 1, 1]} : vector<4x2x256xf32> to vector<4x1x128xf32>
    %14 = vector.shape_cast %13 : vector<4x1x128xf32> to vector<4x128xf32>
    %15 = tpu.concatenate %6, %8, %10, %12, %14 in 0 : vector<4x128xf32>, vector<4x128xf32>, vector<4x128xf32>, vector<4x128xf32>, vector<4x128xf32> -> vector<20x128xf32>
    %c0_9 = arith.constant 0 : index
    %c0_10 = arith.constant 0 : index
    %c0_11 = arith.constant 0 : index
    %16 = vector.load %arg5[%c0_9, %c0_10, %c0_11] : memref<1x8x20xf32, #tpu.memory_space<vmem>>, vector<1x8x20xf32>
    %17 = vector.shape_cast %16 : vector<1x8x20xf32> to vector<8x20xf32>
    %cst = arith.constant dense<0.000000e+00> : vector<8x128xf32>
    %18 = tpu.matmul %17, %15, %cst {dimension_numbers = #tpu.dot_dimension_numbers<[1], [0], [0], [1], [0, 0, 1, 1], [], []>} : vector<8x20xf32>, vector<20x128xf32>, vector<8x128xf32> -> vector<8x128xf32>
    %c0_12 = arith.constant 0 : index
    %c0_13 = arith.constant 0 : index
    %c0_14 = arith.constant 0 : index
    %19 = vector.load %arg6[%c0_12, %c0_13, %c0_14] : memref<1x8x1xf32, #tpu.memory_space<vmem>>, vector<1x8x1xf32>
    %20 = vector.shape_cast %19 : vector<1x8x1xf32> to vector<8x1xf32>
    %21 = vector.broadcast %20 : vector<8x1xf32> to vector<8x128xf32>
    %22 = arith.addf %18, %21 : vector<8x128xf32>
    %cst_15 = arith.constant 0.000000e+00 : f32
    %23 = vector.broadcast %cst_15 : f32 to vector<8x128xf32>
    %24 = arith.cmpf oge, %22, %23 : vector<8x128xf32>
    %cst_16 = arith.constant 1.000000e-01 : f32
    %25 = vector.broadcast %cst_16 : f32 to vector<8x128xf32>
    %26 = arith.mulf %25, %22 : vector<8x128xf32>
    %27 = arith.select %24, %22, %26 : vector<8x128xi1>, vector<8x128xf32>
    %c0_17 = arith.constant 0 : index
    %c0_18 = arith.constant 0 : index
    %c0_19 = arith.constant 0 : index
    %c0_20 = arith.constant 0 : index
    %28 = vector.load %arg7[%c0_17, %c0_18, %c0_19, %c0_20] : memref<1x1x8x128xf32, #tpu.memory_space<vmem>>, vector<1x1x8x128xf32>
    %29 = vector.shape_cast %28 : vector<1x1x8x128xf32> to vector<8x128xf32>
    %30 = vector.shape_cast %27 : vector<8x128xf32> to vector<1x1x8x128xf32>
    tpu.vector_store %arg7[%c0_17, %c0_18, %c0_19, %c0_20], %30 {strides = array<i32>} : memref<1x1x8x128xf32, #tpu.memory_space<vmem>>, vector<1x1x8x128xf32>,
    return
  }
  func.func @transform_0(%arg0: i32, %arg1: i32, %arg2: i32) -> (i32, i32, i32, i32, i32) {
    %c0_i32 = arith.constant 0 : i32
    %c0_i32_0 = arith.constant 0 : i32
    %c0_i32_1 = arith.constant 0 : i32
    return %arg0, %arg1, %c0_i32, %c0_i32_0, %arg2 : i32, i32, i32, i32, i32
  }
  func.func @transform_1(%arg0: i32, %arg1: i32, %arg2: i32) -> (i32, i32, i32, i32, i32) {
    %c1_i32 = arith.constant 1 : i32
    %0 = arith.addi %arg2, %c1_i32 : i32
    %c1_i32_0 = arith.constant 1 : i32
    %1 = arith.muli %0, %c1_i32_0 : i32
    %c0_i32 = arith.constant 0 : i32
    %c0_i32_1 = arith.constant 0 : i32
    %c0_i32_2 = arith.constant 0 : i32
    return %arg0, %arg1, %c0_i32, %c0_i32_1, %1 : i32, i32, i32, i32, i32
  }
  func.func @transform_2(%arg0: i32, %arg1: i32, %arg2: i32) -> (i32, i32, i32) {
    %c0_i32 = arith.constant 0 : i32
    %c0_i32_0 = arith.constant 0 : i32
    %c0_i32_1 = arith.constant 0 : i32
    return %arg1, %c0_i32, %c0_i32_0 : i32, i32, i32
  }
  func.func @transform_3(%arg0: i32, %arg1: i32, %arg2: i32) -> (i32, i32, i32) {
    %c0_i32 = arith.constant 0 : i32
    %c0_i32_0 = arith.constant 0 : i32
    %c0_i32_1 = arith.constant 0 : i32
    return %arg1, %c0_i32, %c0_i32_0 : i32, i32, i32
  }
  func.func @transform_4(%arg0: i32, %arg1: i32, %arg2: i32) -> (i32, i32, i32, i32) {
    %c0_i32 = arith.constant 0 : i32
    %c0_i32_0 = arith.constant 0 : i32
    return %arg0, %arg1, %c0_i32, %arg2 : i32, i32, i32, i32
  }
}

</mosaic_0001>

<llo_original>
// kernel: tpu_custom_call.1
$region0: #{tpu_custom_call.1}
  #allocation0 [shape = 'u32[]', space=smem, size = 0x4, offset = 0x4, fixed_abs, tag = 'smem constant byte address 0x4 - core index']
  #allocation1 [shape = 'u32[144,128]{1,0:T(1,128)}', space=vmem, size = 0x12000, scoped, tag = 'internal scratch']
  %s0 = inlined_call_operand.hbm [shape: f32[2,2,4,2,256], index: 0, kind: input, shape index: {}]
  %s1 = inlined_call_operand.hbm [shape: f32[2,2,4,2,256], index: 1, kind: input, shape index: {}]
  %s2 = inlined_call_operand.vmem [shape: f32[2,8,20], index: 2, kind: input, shape index: {}]
  %s3 = inlined_call_operand.vmem [shape: f32[2,8,1], index: 3, kind: input, shape index: {}]
  %s4 = inlined_call_operand.hbm [shape: f32[2,2,8,128], index: 4, kind: output, shape index: {}]
  %s5 = sld [smem:[#allocation0]]
  $region57: #{tpu_custom_call.1} parent=0
    _
  %s7 = ssub.s32 1, %s5
  %s8 = scalar_select 0, %s7, %s5
  $region1: #{tpu_custom_call.1} parent=0
    #allocation2 [shape = 'u8[8192]{0}', space=vmem, size = 0x2000, scoped, tag = 'input window, operand 0']
    #allocation3 [shape = 's32[2]{0}', space=sflag, size = 0x8, scoped, tag = 'scoped memory for tpu_custom_call.1']
    #allocation4 [shape = 's32[2]{0}', space=sflag, size = 0x8, scoped, tag = 'scoped memory for tpu_custom_call.1']
    #allocation5 [shape = 'u8[8192]{0}', space=vmem, size = 0x2000, scoped, tag = 'input window, operand 1']
    #allocation6 [shape = 's32[2]{0}', space=sflag, size = 0x8, scoped, tag = 'scoped memory for tpu_custom_call.1']
    #allocation7 [shape = 'u8[8192]{0}', space=vmem, size = 0x2000, scoped, tag = 'output window, operand 0']
    %9 = vsyncpa [#allocation3], 0
    %s10 = scalar_lea.sflag [#allocation3], 1
    %11 = vsyncpa %s10, 0
    %12 = vsyncpa [#allocation6], 0
    %s13 = scalar_lea.sflag [#allocation6], 1
    %14 = vsyncpa %s13, 0
    %15 = vsyncpa [#allocation4], 0
    %s16 = scalar_lea.sflag [#allocation4], 1
    %17 = vsyncpa %s16, 0
    loop: start=0, step=1, limit=6
    $region2: #{tpu_custom_call.1} parent=1 // loop_pre_header
      _
    $region3: #{tpu_custom_call.1} parent=1 // loop_header
      %s19 = sphi 0, %s23
      %p20 = scmp.ge.s32.totalorder %s19, 6
      %s26 = sphi 0, %s45
      %s27 = sphi 0, %s41
      %s28 = sphi 0, %s37
      %s29 = sphi 0, %s26
      %s30 = sphi 0, %s27
      %s31 = sphi 0, %s28
      %s32 = sphi 0, %s29
      %s33 = sphi 0, %s30
      %s34 = sphi 0, %s31
      %s52 = sphi 0, %s54
      %s55 = sphi 0, %s52
      %s56 = sphi 0, %s55
      %s72 = sphi 0, %s56
      %s84 = sphi 0, %s86
      %s87 = sphi 0, %s84
      %s88 = sphi 0, %s87
      %s104 = sphi 0, %s88
      %s110 = sphi 0, %s112
      %s113 = sphi 0, %s110
      %s114 = sphi 0, %s113
      %s130 = sphi 0, %s114
      %s136 = sphi 0, %s138
      %s139 = sphi 0, %s136
      %s140 = sphi 0, %s139
      %s156 = sphi 0, %s140
      %s166 = sphi 0, %s168
      %s169 = sphi 0, %s166
      %s170 = sphi 0, %s169
      %s186 = sphi 0, %s170
    $region4: #{tpu_custom_call.1} parent=1 // loop_header_branch
      %22 = sbr.rel (%p20) target = $region8
    $region5: #{tpu_custom_call.1} parent=1 // loop_body
      %s24 = ssub.s32 %s19, 1
      %s25 = ssub.s32 %s19, 2
      %s35 = sadd.s32 1, %s28
      %p36 = scmp.ge.s32.totalorder %s35, 1
      %s37 = scalar_select %p36, 0, %s35
      %s38 = sadd.s32 1, %s27
      %s39 = scalar_select %p36, %s38, %s27
      %p40 = scmp.ge.s32.totalorder %s39, 2
      %s41 = scalar_select %p40, 0, %s39
      %s42 = sadd.s32 1, %s26
      %s43 = scalar_select %p40, %s42, %s26
      %p44 = scmp.ge.s32.totalorder %s43, 2
      %s45 = scalar_select %p44, 0, %s43
      %s46 = ssub.s32 %s26, %s45
      %s47 = ssub.s32 %s27, %s41
      %s48 = sor.u32 %s46, %s47
      %s49 = ssub.s32 %s28, %s37
      %s50 = sor.u32 %s48, %s49
      %p51 = scmp.eq.s32.totalorder %s50, 0
      %s53 = sadd.s32 %s52, 1
      %s54 = scalar_select %p51, %s52, %s53
      %p57 = pneg %p51
      %p58 = scmp.eq.s32.totalorder %s19, 3
      %p59 = por %p57, %p58
      %p60 = scmp.ne.s32.totalorder %s52, %s55
      %p61 = scmp.eq.s32.totalorder %s19, 0
      %p62 = por %p60, %p61
      %p63 = scmp.ne.s32.totalorder %s52, %s55
      %p64 = scmp.eq.s32.totalorder %s24, 3
      %p65 = por %p63, %p64
      %p66 = scmp.ne.s32.totalorder %s55, %s56
      %p67 = scmp.eq.s32.totalorder %s24, 0
      %p68 = por %p66, %p67
      %p69 = scmp.ne.s32.totalorder %s55, %s56
      %p70 = scmp.eq.s32.totalorder %s25, 3
      %p71 = por %p69, %p70
      %p73 = scmp.ne.s32.totalorder %s56, %s72
      %p74 = scmp.eq.s32.totalorder %s25, 0
      %p75 = por %p73, %p74
      %s76 = sadd.s32 %s28, 1
      %s77 = sadd.s32 %s37, 1
      %s78 = ssub.s32 %s26, %s45
      %s79 = ssub.s32 %s27, %s41
      %s80 = sor.u32 %s78, %s79
      %s81 = ssub.s32 %s76, %s77
      %s82 = sor.u32 %s80, %s81
      %p83 = scmp.eq.s32.totalorder %s82, 0
      %s85 = sadd.s32 %s84, 1
      %s86 = scalar_select %p83, %s84, %s85
      %p89 = pneg %p83
      %p90 = scmp.eq.s32.totalorder %s19, 3
      %p91 = por %p89, %p90
      %p92 = scmp.ne.s32.totalorder %s84, %s87
      %p93 = scmp.eq.s32.totalorder %s19, 0
      %p94 = por %p92, %p93
      %p95 = scmp.ne.s32.totalorder %s84, %s87
      %p96 = scmp.eq.s32.totalorder %s24, 3
      %p97 = por %p95, %p96
      %p98 = scmp.ne.s32.totalorder %s87, %s88
      %p99 = scmp.eq.s32.totalorder %s24, 0
      %p100 = por %p98, %p99
      %p101 = scmp.ne.s32.totalorder %s87, %s88
      %p102 = scmp.eq.s32.totalorder %s25, 3
      %p103 = por %p101, %p102
      %p105 = scmp.ne.s32.totalorder %s88, %s104
      %p106 = scmp.eq.s32.totalorder %s25, 0
      %p107 = por %p105, %p106
      %s108 = ssub.s32 %s27, %s41
      %p109 = scmp.eq.s32.totalorder %s108, 0
      %s111 = sadd.s32 %s110, 1
      %s112 = scalar_select %p109, %s110, %s111
      %p115 = pneg %p109
      %p116 = scmp.eq.s32.totalorder %s19, 3
      %p117 = por %p115, %p116
      %p118 = scmp.ne.s32.totalorder %s110, %s113
      %p119 = scmp.eq.s32.totalorder %s19, 0
      %p120 = por %p118, %p119
      %p121 = scmp.ne.s32.totalorder %s110, %s113
      %p122 = scmp.eq.s32.totalorder %s24, 3
      %p123 = por %p121, %p122
      %p124 = scmp.ne.s32.totalorder %s113, %s114
      %p125 = scmp.eq.s32.totalorder %s24, 0
      %p126 = por %p124, %p125
      %p127 = scmp.ne.s32.totalorder %s113, %s114
      %p128 = scmp.eq.s32.totalorder %s25, 3
      %p129 = por %p127, %p128
      %p131 = scmp.ne.s32.totalorder %s114, %s130
      %p132 = scmp.eq.s32.totalorder %s25, 0
      %p133 = por %p131, %p132
      %s134 = ssub.s32 %s27, %s41
      %p135 = scmp.eq.s32.totalorder %s134, 0
      %s137 = sadd.s32 %s136, 1
      %s138 = scalar_select %p135, %s136, %s137
      %p141 = pneg %p135
      %p142 = scmp.eq.s32.totalorder %s19, 3
      %p143 = por %p141, %p142
      %p144 = scmp.ne.s32.totalorder %s136, %s139
      %p145 = scmp.eq.s32.totalorder %s19, 0
      %p146 = por %p144, %p145
      %p147 = scmp.ne.s32.totalorder %s136, %s139
      %p148 = scmp.eq.s32.totalorder %s24, 3
      %p149 = por %p147, %p148
      %p150 = scmp.ne.s32.totalorder %s139, %s140
      %p151 = scmp.eq.s32.totalorder %s24, 0
      %p152 = por %p150, %p151
      %p153 = scmp.ne.s32.totalorder %s139, %s140
      %p154 = scmp.eq.s32.totalorder %s25, 3
      %p155 = por %p153, %p154
      %p157 = scmp.ne.s32.totalorder %s140, %s156
      %p158 = scmp.eq.s32.totalorder %s25, 0
      %p159 = por %p157, %p158
      %s160 = ssub.s32 %s26, %s45
      %s161 = ssub.s32 %s27, %s41
      %s162 = sor.u32 %s160, %s161
      %s163 = ssub.s32 %s28, %s37
      %s164 = sor.u32 %s162, %s163
      %p165 = scmp.eq.s32.totalorder %s164, 0
      %s167 = sadd.s32 %s166, 1
      %s168 = scalar_select %p165, %s166, %s167
      %p171 = pneg %p165
      %p172 = scmp.eq.s32.totalorder %s19, 3
      %p173 = por %p171, %p172
      %p174 = scmp.ne.s32.totalorder %s166, %s169
      %p175 = scmp.eq.s32.totalorder %s19, 0
      %p176 = por %p174, %p175
      %p177 = scmp.ne.s32.totalorder %s166, %s169
      %p178 = scmp.eq.s32.totalorder %s24, 3
      %p179 = por %p177, %p178
      %p180 = scmp.ne.s32.totalorder %s169, %s170
      %p181 = scmp.eq.s32.totalorder %s24, 0
      %p182 = por %p180, %p181
      %p183 = scmp.ne.s32.totalorder %s169, %s170
      %p184 = scmp.eq.s32.totalorder %s25, 3
      %p185 = por %p183, %p184
      %p187 = scmp.ne.s32.totalorder %s170, %s186
      %p188 = scmp.eq.s32.totalorder %s25, 0
      %p189 = por %p187, %p188
      %p190 = scmp.le.s32.totalorder 1, %s19
      %p191 = scmp.lt.s32.totalorder %s19, 5
      %p192 = pnand %p190, %p191
      %p193 = pneg %p192
      // Predicated region
      $region9: #{tpu_custom_call.1} parent=5 // pred_check
        _
      $region10: #{tpu_custom_call.1} parent=5 // pred_check_branch
        %195 = sbr.rel (%p192) target = $region12
      $region11: #{tpu_custom_call.1} parent=5 // pred_region
        %s196 = ssub.s32 %s19, 1
      $region12: #{tpu_custom_call.1} parent=5 // pred_fallthru
        _
      %p197 = scmp.lt.s32.totalorder %s19, 4
      // Predicated region
      $region13: #{tpu_custom_call.1} parent=5 // pred_check
        %p198 = pneg %p197
      $region14: #{tpu_custom_call.1} parent=5 // pred_check_branch
        %200 = sbr.rel (%p198) target = $region16
      $region15: #{tpu_custom_call.1} parent=5 // pred_region
        // Predicated region
        $region17: #{tpu_custom_call.1} parent=15 // pred_check
          %p201 = pneg %p62
        $region18: #{tpu_custom_call.1} parent=15 // pred_check_branch
          %203 = sbr.rel (%p201) target = $region20
        $region19: #{tpu_custom_call.1} parent=15 // pred_region
          %s204 = sand.u32 %s52, 1
          %s205 = scalar_lea.sflag [#allocation3], %s204
          %s206 = sand.u32 %s52, 1
          %s207 = smul.addr %s206, 8
          %s208 = scalar_lea.vmem [#allocation2], %s207
          %s210 = ssub.s32 128, 128
          %211 = vsyncadd %s205, %s210
          %s212 = smul.addr %s27, 8
          %s213 = sadd.s32 %s28, %s212
          %s214 = smul.addr %s26, 16
          %s215 = sadd.s32 %s213, %s214
          %s216 = smul.addr %s215, 32
          %s217 = scalar_lea.hbm %s0, %s216
          %s218 = sshll.u32 %s208, 4
          %s219 = int_to_ptr.vmem [resolvable:$true] %s218
          %224 = dma.hbm_to_vmem [thread:$0]  %s217, 128, %s219, %s205, 64, 32, 2
        $region20: #{tpu_custom_call.1} parent=15 // pred_fallthru
          _
        // Predicated region
        $region21: #{tpu_custom_call.1} parent=15 // pred_check
          %p225 = pneg %p94
        $region22: #{tpu_custom_call.1} parent=15 // pred_check_branch
          %227 = sbr.rel (%p225) target = $region24
        $region23: #{tpu_custom_call.1} parent=15 // pred_region
          %s228 = sand.u32 %s84, 1
          %s229 = scalar_lea.sflag [#allocation6], %s228
          %s230 = sand.u32 %s84, 1
          %s231 = smul.addr %s230, 8
          %s232 = scalar_lea.vmem [#allocation5], %s231
          %s233 = sadd.s32 %s28, 1
          %s235 = ssub.s32 128, 128
          %236 = vsyncadd %s229, %s235
          %s237 = smul.addr %s27, 8
          %s238 = sadd.s32 %s233, %s237
          %s239 = smul.addr %s26, 16
          %s240 = sadd.s32 %s238, %s239
          %s241 = smul.addr %s240, 32
          %s242 = scalar_lea.hbm %s1, %s241
          %s243 = sshll.u32 %s232, 4
          %s244 = int_to_ptr.vmem [resolvable:$true] %s243
          %249 = dma.hbm_to_vmem [thread:$0]  %s242, 128, %s244, %s229, 64, 32, 2
        $region24: #{tpu_custom_call.1} parent=15 // pred_fallthru
          _
        // Predicated region
        $region25: #{tpu_custom_call.1} parent=15 // pred_check
          %p250 = pneg %p120
        $region26: #{tpu_custom_call.1} parent=15 // pred_check_branch
          %252 = sbr.rel (%p250) target = $region28
        $region27: #{tpu_custom_call.1} parent=15 // pred_region
          %p253 = scmp.lt.s32.totalorder %s27, 1
          %s254 = scalar_select %p253, %s27, 1
          %s255 = smul.addr %s254, 8
          %s256 = scalar_lea.vmem %s2, %s255
        $region28: #{tpu_custom_call.1} parent=15 // pred_fallthru
          _
        // Predicated region
        $region29: #{tpu_custom_call.1} parent=15 // pred_check
          %p257 = pneg %p146
        $region30: #{tpu_custom_call.1} parent=15 // pred_check_branch
          %259 = sbr.rel (%p257) target = $region32
        $region31: #{tpu_custom_call.1} parent=15 // pred_region
          %p260 = scmp.lt.s32.totalorder %s27, 1
          %s261 = scalar_select %p260, %s27, 1
          %s262 = smul.addr %s261, 8
          %s263 = scalar_lea.vmem %s3, %s262
        $region32: #{tpu_custom_call.1} parent=15 // pred_fallthru
          _
      $region16: #{tpu_custom_call.1} parent=5 // pred_fallthru
        _
      %p264 = scmp.le.s32.totalorder 1, %s19
      %p265 = scmp.lt.s32.totalorder %s19, 5
      %p266 = pnand %p264, %p265
      %p267 = pneg %p266
      // Predicated region
      $region33: #{tpu_custom_call.1} parent=5 // pred_check
        _
      $region34: #{tpu_custom_call.1} parent=5 // pred_check_branch
        %269 = sbr.rel (%p266) target = $region36
      $region35: #{tpu_custom_call.1} parent=5 // pred_region
        %s270 = ssub.s32 %s19, 1
        %s271 = sand.u32 %s55, 1
        %s272 = scalar_lea.sflag [#allocation3], %s271
        %s273 = sand.u32 %s55, 1
        %s274 = smul.addr %s273, 8
        %s275 = scalar_lea.vmem [#allocation2], %s274
        // Predicated region
        $region37: #{tpu_custom_call.1} parent=35 // pred_check
          %p276 = pneg %p68
        $region38: #{tpu_custom_call.1} parent=35 // pred_check_branch
          %278 = sbr.rel (%p276) target = $region40
        $region39: #{tpu_custom_call.1} parent=35 // pred_region
          %279 = dma.done %s272, 128
        $region40: #{tpu_custom_call.1} parent=35 // pred_fallthru
          _
        %s280 = sand.u32 %s87, 1
        %s281 = scalar_lea.sflag [#allocation6], %s280
        %s282 = sand.u32 %s87, 1
        %s283 = smul.addr %s282, 8
        %s284 = scalar_lea.vmem [#allocation5], %s283
        // Predicated region
        $region41: #{tpu_custom_call.1} parent=35 // pred_check
          %p285 = pneg %p100
        $region42: #{tpu_custom_call.1} parent=35 // pred_check_branch
          %287 = sbr.rel (%p285) target = $region44
        $region43: #{tpu_custom_call.1} parent=35 // pred_region
          %288 = dma.done %s281, 128
        $region44: #{tpu_custom_call.1} parent=35 // pred_fallthru
          _
        %s289 = sand.u32 %s55, 1
        %s290 = scalar_lea.sflag [#allocation3], %s289
        %s291 = sand.u32 %s55, 1
        %s292 = smul.addr %s291, 8
        %s293 = scalar_lea.vmem [#allocation2], %s292
        %p294 = pneg %p68
        %p295 = pneg %p65
        %s296 = sand.u32 %s87, 1
        %s297 = scalar_lea.sflag [#allocation6], %s296
        %s298 = sand.u32 %s87, 1
        %s299 = smul.addr %s298, 8
        %s300 = scalar_lea.vmem [#allocation5], %s299
        %p301 = pneg %p100
        %p302 = pneg %p97
        %p303 = scmp.lt.s32.totalorder %s30, 1
        %s304 = scalar_select %p303, %s30, 1
        %s305 = smul.addr %s304, 8
        %s306 = scalar_lea.vmem %s2, %s305
        %p307 = pneg %p126
        %p308 = pneg %p123
        %p309 = scmp.lt.s32.totalorder %s30, 1
        %s310 = scalar_select %p309, %s30, 1
        %s311 = smul.addr %s310, 8
        %s312 = scalar_lea.vmem %s3, %s311
        %p313 = pneg %p152
        %p314 = pneg %p149
        %p315 = pneg %p182
        %p316 = pneg %p179
        %s317 = sand.u32 %s169, 1
        %s318 = scalar_lea.sflag [#allocation4], %s317
        %s319 = sand.u32 %s169, 1
        %s320 = smul.addr %s319, 8
        %s321 = scalar_lea.vmem [#allocation7], %s320
        %s322 = sadd.s32 %s31, 1
        %p323 = scmp.lt.s32.totalorder %s30, 1
        %s324 = scalar_select %p323, %s30, 1
        %s325 = smul.addr %s324, 8
        %s326 = scalar_lea.vmem %s2, %s325
        %p327 = scmp.lt.s32.totalorder %s30, 1
        %s328 = scalar_select %p327, %s30, 1
        %s329 = smul.addr %s328, 8
        %s330 = scalar_lea.vmem %s3, %s329
        %v331 = vld [vmem:[%s275] sm:$0x3]
        %v332 = vld [vmem:[%s275 + $0x2] sm:$0x3]
        %v333 = vld [vmem:[%s275 + $0x4] sm:$0x3]
        %v334 = vld [vmem:[%s275 + $0x6] sm:$0x3]
        %v335 = vld [vmem:[%s284] sm:$0x3]
        %v336 = vld [vmem:[%s284 + $0x2] sm:$0x3]
        %v337 = vld [vmem:[%s284 + $0x4] sm:$0x3]
        %v338 = vld [vmem:[%s284 + $0x6] sm:$0x3]
        %v343 = vrot.slane %v332, 7
        %vm344 = vcmask 1041409
        %v345 = vsel %vm344, %v343, %v331
        %v346 = vrot.slane %v333, 6
        %vm347 = vcmask 1042434
        %v348 = vsel %vm347, %v346, %v345
        %v349 = vrot.slane %v334, 5
        %vm350 = vcmask 1043459
        %v351 = vsel %vm350, %v349, %v348
        %v353 = vrot.slane %v331, 5
        %v354 = vrot.slane %v332, 4
        %vm355 = vcmask 1045509
        %v356 = vsel %vm355, %v354, %v353
        %v357 = vrot.slane %v333, 3
        %vm358 = vcmask 1046534
        %v359 = vsel %vm358, %v357, %v356
        %v360 = vrot.slane %v334, 2
        %vm361 = vcmask 1047559
        %v362 = vsel %vm361, %v360, %v359
        %v368 = vrot.slane %v336, 7
        %v369 = vsel %vm344, %v368, %v335
        %v370 = vrot.slane %v337, 6
        %v371 = vsel %vm347, %v370, %v369
        %v372 = vrot.slane %v338, 5
        %v373 = vsel %vm350, %v372, %v371
        %374 = vrot.lane.b32.xlu0 %v351, 127
        %v375 = vpop.permute.xlu0 %374
        %376 = vrot.lane.b32.xlu0 %v373, 127
        %v377 = vpop.permute.xlu0 %376
        %vm378 = vcmask 1039360
        %v379 = vsel %vm378, %v375, %v377
        %v381 = vrot.slane %v335, 5
        %v382 = vrot.slane %v336, 4
        %v383 = vsel %vm355, %v382, %v381
        %v384 = vrot.slane %v337, 3
        %v385 = vsel %vm358, %v384, %v383
        %v386 = vrot.slane %v338, 2
        %v387 = vsel %vm361, %v386, %v385
        %388 = vrot.lane.b32.xlu0 %v362, 127
        %v389 = vpop.permute.xlu0 %388
        %390 = vrot.lane.b32.xlu0 %v387, 127
        %v391 = vpop.permute.xlu0 %390
        %v392 = vsel %vm378, %v389, %v391
        %394 = vrot.lane.b32.xlu0 %v351, 126
        %v395 = vpop.permute.xlu0 %394
        %396 = vrot.lane.b32.xlu0 %v373, 126
        %v397 = vpop.permute.xlu0 %396
        %vm398 = vcmask 1031168
        %v399 = vsel %vm398, %v395, %v397
        %vm400 = vcmask 1043456
        %v401 = vsel %vm400, %v351, %v362
        %v402 = vsel %vm400, %v379, %v392
        %v403 = vld [vmem:[%s326] sm:$0xff]
        %v404 = vld [vmem:[%s330] sm:$0xff]
        %406 = vset.pattern.permute.xlu0 0
        %407 = vperm.xlu0 %406, %v404
        %v408 = vpop.permute.xlu0 %407
        %vm410 = vcmask 162816
        %v412 = vsel %vm410, %v403, 0
        %v414 = vsel %vm400, %v399, 0
        %416 = vmatprep.subr.mxu0 0.0
        %417 = vmatpush1.msra.mxu0 %v401
        %418 = vmatprep.subr.mxu0 0.0
        %419 = vmatpush1.msra.mxu0 %v402
        %420 = vmatprep.subr.mxu0 0.0
        %421 = vmatpush1.msra.mxu0 %v414
        %422 = vmatprep.subr.mxu0 0.0
        %423 = vmatpush1.msra.mxu0 0.0
        %424 = vmatprep.subr.mxu0 0.0
        %425 = vmatpush1.msra.mxu0 0.0
        %426 = vmatprep.subr.mxu0 0.0
        %427 = vmatpush1.msra.mxu0 0.0
        %428 = vmatprep.subr.mxu0 0.0
        %429 = vmatpush1.msra.mxu0 0.0
        %430 = vmatprep.subr.mxu0 0.0
        %431 = vmatpush1.msra.mxu0 0.0
        %432 = vmatprep.subr.mxu0 0.0
        %433 = vmatpush1.msra.mxu0 0.0
        %434 = vmatprep.subr.mxu0 0.0
        %435 = vmatpush1.msra.mxu0 0.0
        %436 = vmatprep.subr.mxu0 0.0
        %437 = vmatpush1.msra.mxu0 0.0
        %438 = vmatprep.subr.mxu0 0.0
        %439 = vmatpush1.msra.mxu0 0.0
        %440 = vmatprep.subr.mxu0 0.0
        %441 = vmatpush1.msra.mxu0 0.0
        %442 = vmatprep.subr.mxu0 0.0
        %443 = vmatpush1.msra.mxu0 0.0
        %444 = vmatprep.subr.mxu0 0.0
        %445 = vmatpush1.msra.mxu0 0.0
        %446 = vmatprep.subr.mxu0 0.0
        %447 = vmatpush1.msra.mxu0 0.0
        %448 = vmatprep.subr.mxu0 0.0
        %449 = vmatpush1.msra.mxu0 0.0
        %450 = vmatprep.subr.mxu0 0.0
        %451 = vmatpush1.msra.mxu0 0.0
        %452 = vmatprep.subr.mxu0 0.0
        %453 = vmatpush1.msra.mxu0 0.0
        %454 = vmatprep.subr.mxu0 0.0
        %455 = vmatpush1.msra.mxu0 0.0
        %456 = vmatprep.subr.mxu0 0.0
        %457 = vmatpush1.msra.mxu0 0.0
        %458 = vmatprep.subr.mxu0 0.0
        %459 = vmatpush1.msra.mxu0 0.0
        %460 = vmatprep.subr.mxu0 0.0
        %461 = vmatpush1.msra.mxu0 0.0
        %462 = vmatprep.subr.mxu0 0.0
        %463 = vmatpush1.msra.mxu0 0.0
        %464 = vmatprep.subr.mxu0 0.0
        %465 = vmatpush1.msra.mxu0 0.0
        %466 = vmatprep.subr.mxu0 0.0
        %467 = vmatpush1.msra.mxu0 0.0
        %468 = vmatprep.subr.mxu0 0.0
        %469 = vmatpush1.msra.mxu0 0.0
        %470 = vmatprep.subr.mxu0 0.0
        %471 = vmatpush1.msra.mxu0 0.0
        %472 = vmatprep.subr.mxu0 0.0
        %473 = vmatpush1.msra.mxu0 0.0
        %474 = vmatprep.subr.mxu0 0.0
        %475 = vmatpush1.msra.mxu0 0.0
        %476 = vmatprep.subr.mxu0 0.0
        %477 = vmatpush1.msra.mxu0 0.0
        %478 = vmatprep.subr.mxu0 0.0
        %479 = vmatpush1.msra.mxu0 0.0
        %480 = vmatprep.mubr.f32.mxu0 0.0
        %481 = vmatmul.mubr.f32.gmra.mrb[0].mxu0 %v412
        %v482 = vpop.f32.mrb[0].mxu0
        %v483 = vadd.f32 %v408, %v482
        %v484 = vpop.f32.mrb[0].mxu0
        %485 = vdwg.mxu0
        %vm486 = vcmp.ge.f32.partialorder %v483, 0.0
        %v487 = vmul.f32 %v483, 0.1
        %v488 = vsel %vm486, %v483, %v487
        %489 = vst [vmem:[%s321] sm:$0xff] %v488
        %s490 = sand.u32 %s169, 1
        %s491 = scalar_lea.sflag [#allocation4], %s490
        %s492 = sand.u32 %s169, 1
        %s493 = smul.addr %s492, 8
        %s494 = scalar_lea.vmem [#allocation7], %s493
        // Predicated region
        $region45: #{tpu_custom_call.1} parent=35 // pred_check
          %p495 = pneg %p179
        $region46: #{tpu_custom_call.1} parent=35 // pred_check_branch
          %497 = sbr.rel (%p495) target = $region48
        $region47: #{tpu_custom_call.1} parent=35 // pred_region
          %s499 = ssub.s32 128, 128
          %500 = vsyncadd %s491, %s499
          %s501 = sadd.s32 %s31, %s30
          %s502 = smul.addr %s29, 2
          %s503 = sadd.s32 %s501, %s502
          %s504 = smul.addr %s503, 128
          %s505 = scalar_lea.hbm %s4, %s504
          %s507 = sshll.u32 %s494, 4
          %s508 = int_to_ptr.vmem [resolvable:$true] %s507
          %510 = dma.vmem_to_hbm [thread:$0]  %s508, 128, %s505, %s491
        $region48: #{tpu_custom_call.1} parent=35 // pred_fallthru
          _
      $region36: #{tpu_custom_call.1} parent=5 // pred_fallthru
        _
      %p511 = scmp.le.s32.totalorder 2, %s19
      // Predicated region
      $region49: #{tpu_custom_call.1} parent=5 // pred_check
        %p512 = pneg %p511
      $region50: #{tpu_custom_call.1} parent=5 // pred_check_branch
        %514 = sbr.rel (%p512) target = $region52
      $region51: #{tpu_custom_call.1} parent=5 // pred_region
        %s515 = ssub.s32 %s19, 2
        // Predicated region
        $region53: #{tpu_custom_call.1} parent=51 // pred_check
          %p516 = pneg %p185
        $region54: #{tpu_custom_call.1} parent=51 // pred_check_branch
          %518 = sbr.rel (%p516) target = $region56
        $region55: #{tpu_custom_call.1} parent=51 // pred_region
          %s519 = sand.u32 %s170, 1
          %s520 = scalar_lea.sflag [#allocation4], %s519
          %s521 = sand.u32 %s170, 1
          %s522 = smul.addr %s521, 8
          %s523 = scalar_lea.vmem [#allocation7], %s522
          %524 = dma.done %s520, 128
        $region56: #{tpu_custom_call.1} parent=51 // pred_fallthru
          _
      $region52: #{tpu_custom_call.1} parent=5 // pred_fallthru
        _
    $region6: #{tpu_custom_call.1} parent=1 // loop_footer
      %s23 = sadd.s32 1, %s19
    $region7: #{tpu_custom_call.1} parent=1 // loop_footer_branch
      %18 = sbr.rel target = $region3
    $region8: #{tpu_custom_call.1} parent=1 // loop_exit
      _
    %525 = vsyncpa [#allocation3], 1
    %s526 = scalar_lea.sflag [#allocation3], 1
    %527 = vsyncpa %s526, 1
    %528 = vsyncpa [#allocation6], 1
    %s529 = scalar_lea.sflag [#allocation6], 1
    %530 = vsyncpa %s529, 1
    %531 = vsyncpa [#allocation4], 1
    %s532 = scalar_lea.sflag [#allocation4], 1
    %533 = vsyncpa %s532, 1

</llo_original>
